<compile_context>
chip_gen: v5e
topology: v5e:2x2
jax: 0.10.0
libtpu: 0.0.40
codegen_flags: <defaults>
</compile_context>

<pallas_src>
import functools

import jax
import jax.numpy as jnp
from jax.experimental import pallas as pl
from jax.experimental.pallas import tpu as pltpu

PAD_F = 128          # padded hidden feature width (lane dim)
SUBLANE = 8          # sublane granularity
TILE_ALIGN = 32      # batch tiles rounded to 32 rows -> split cleanly into 4 sub-tiles
MAX_TB = 1024        # max batch-tile rows (footprint ~ few MiB, fine on all gens)
NUM_LAYERS = 7
B_ROWS = 8           # bias stack rows (7 layers rounded up to sublane)


def _round_up(n, m):
    return ((n + m - 1) // m) * m


def _choose_batch_tile(batch):
    """Balanced batch tile: >=2 grid steps once batch > TILE_ALIGN, <= MAX_TB rows."""
    if batch <= TILE_ALIGN:                       # tiny batch: one small tile
        return _round_up(batch, SUBLANE)
    n_tiles = max(2, -(-batch // MAX_TB))         # >=2 steps (v7x megacore), cap rows
    tb = -(-batch // n_tiles)                     # balanced tiles (small tail waste)
    tb = _round_up(tb, TILE_ALIGN)
    return min(tb, MAX_TB)


def _choose_n_sub(tb):
    """Number of interleaved sub-chains inside one batch tile."""
    if tb % 32 == 0 and tb >= 128:
        return 4
    if tb % 16 == 0 and tb >= 32:
        return 2
    return 1


def _pick_act_dtype():
    """bf16 VPU/EUP path only on v6e/v7x; f32 elsewhere (v5e has no bf16 VPU/EUP)."""
    try:
        kind = jax.devices()[0].device_kind.lower()
    except Exception:
        return "float32"
    if "v6" in kind or "v7" in kind or "7x" in kind:
        return "bfloat16"
    return "float32"


def _mlp_kernel(x_ref, w0_ref, w_ref, b_ref, o_ref, *, act_dtype, n_sub, out_f):
    """One batch tile through the full 7-layer MLP.

    x_ref : (TB, in_f_pad) f32   activation tile (in_f_pad = 8, not 128)
    w0_ref: (in_f_pad, 128) bf16 layer-0 weights
    w_ref : (6, 128, 128) bf16   layers 1..6 weights, (in, out) layout
    b_ref : (8, 128) f32         stacked biases (row l = layer l)
    o_ref : (TB, out_f) f32      narrow output tile (only real columns written)
    """
    tb = x_ref.shape[0]
    sub = tb // n_sub
    last = NUM_LAYERS - 1

    def sigmoid(y):
        # sigmoid(y) == 0.5*tanh(0.5*y) + 0.5 : one EUP op instead of exp + divide.
        return 0.5 * jnp.tanh(0.5 * y) + 0.5

    def bias(l):
        return b_ref[pl.ds(l, 1), :].astype(act_dtype)     # (1, 128), broadcast over rows

    # ---- layer 0: true (8-padded) input width -> K = in_f_pad, not 128 --------
    w0 = w0_ref[...]
    b0 = bias(0)
    hs = []
    for s in range(n_sub):
        x_s = x_ref[pl.ds(s * sub, sub), :].astype(jnp.bfloat16)
        y = jnp.dot(x_s, w0, preferred_element_type=jnp.float32)
        hs.append(sigmoid(y.astype(act_dtype) + b0))

    # ---- layers 1..6: n_sub independent chains, statically interleaved so the
    # MXU matmul of one sub-tile overlaps the VPU/EUP work of another. ----------
    for l in range(1, NUM_LAYERS):
        w_l = w_ref[l - 1]                                  # (128, 128) bf16, VMEM resident
        b_l = bias(l)
        for s in range(n_sub):
            y = jnp.dot(hs[s].astype(jnp.bfloat16), w_l,
                        preferred_element_type=jnp.float32)
            y = y.astype(act_dtype) + b_l
            hs[s] = sigmoid(y) if l < last else y

    # ---- store only the real output columns (narrow writeback) ----------------
    for s in range(n_sub):
        o_ref[pl.ds(s * sub, sub), :] = hs[s][:, :out_f].astype(o_ref.dtype)


def pack_params(params):
    """Pad + stack params once (outside the per-call path).

    Returns:
      w0_p   : (round_up(in_f, 8), 128) bf16  layer-0 weights, zero-padded.
      w_stack: (6, 128, 128) bf16             layers 1..6 weights, zero-padded.
      b_stack: (8, 128) f32                   biases (row 7 unused), zero-padded.
    """
    w0, b0 = params[0]
    in_f, out0 = w0.shape
    assert in_f <= PAD_F and out0 <= PAD_F, "feature widths must be <= 128"
    in_f_pad = _round_up(in_f, SUBLANE)

    w0_p = jnp.zeros((in_f_pad, PAD_F), jnp.bfloat16)
    w0_p = w0_p.at[:in_f, :out0].set(w0.astype(jnp.bfloat16))

    w_stack = jnp.zeros((NUM_LAYERS - 1, PAD_F, PAD_F), jnp.bfloat16)
    b_stack = jnp.zeros((B_ROWS, PAD_F), jnp.float32)
    b_stack = b_stack.at[0, :b0.shape[0]].set(b0.astype(jnp.float32))
    for l in range(1, NUM_LAYERS):
        w, b = params[l]
        assert w.shape[0] <= PAD_F and w.shape[1] <= PAD_F, "feature widths must be <= 128"
        w_stack = w_stack.at[l - 1, : w.shape[0], : w.shape[1]].set(w.astype(jnp.bfloat16))
        b_stack = b_stack.at[l, : b.shape[0]].set(b.astype(jnp.float32))
    return w0_p, w_stack, b_stack


@functools.partial(jax.jit, static_argnames=("output_size", "act_dtype"))
def mlp_forward(x, w0_p, w_stack, b_stack, output_size, act_dtype="float32"):
    """x: (batch, input_size) float32. Returns (batch, output_size) float32."""
    batch, in_f = x.shape
    in_f_pad = w0_p.shape[0]
    assert in_f <= in_f_pad

    tb = _choose_batch_tile(batch)
    b_pad = _round_up(batch, tb)
    n_sub = _choose_n_sub(tb)
    grid = (b_pad // tb,)

    # Only pad features to 8 (sublane), not 128 -> ~16x less input HBM traffic.
    x_p = jnp.pad(x.astype(jnp.float32),
                  ((0, b_pad - batch), (0, in_f_pad - in_f)))

    act_jnp = jnp.bfloat16 if act_dtype == "bfloat16" else jnp.float32
    kernel = functools.partial(_mlp_kernel, act_dtype=act_jnp,
                               n_sub=n_sub, out_f=output_size)

    out = pl.pallas_call(
        kernel,
        out_shape=jax.ShapeDtypeStruct((b_pad, output_size), jnp.float32),
        grid=grid,
        in_specs=[
            # activation tile marches over the batch grid
            pl.BlockSpec((tb, in_f_pad), lambda i: (i, 0)),
            # weights / biases: constant block index -> fetched once, VMEM resident
            pl.BlockSpec((in_f_pad, PAD_F), lambda i: (0, 0)),
            pl.BlockSpec((NUM_LAYERS - 1, PAD_F, PAD_F), lambda i: (0, 0, 0)),
            pl.BlockSpec((B_ROWS, PAD_F), lambda i: (0, 0)),
        ],
        # Narrow output (only the real columns) -> ~32x less output writeback.
        out_specs=pl.BlockSpec((tb, output_size), lambda i: (i, 0)),
        compiler_params=pltpu.CompilerParams(
            dimension_semantics=("parallel",),   # shard grid steps across v7x's 2 TCs
            vmem_limit_bytes=32 << 20,           # footprint is a few MiB; ample slack
        ),
    )(x_p, w0_p, w_stack, b_stack)

    return out[:batch, :]


def init_params(input_size, hidden_size, output_size, key):
    """Deterministic init. Weights stored as (in_features, out_features)."""
    dims = [
        (input_size, hidden_size // 2),
        (hidden_size // 2, hidden_size),
        (hidden_size, hidden_size),
        (hidden_size, hidden_size // 2),
        (hidden_size // 2, hidden_size // 4),
        (hidden_size // 4, hidden_size // 8),
        (hidden_size // 8, output_size),
    ]
    params = []
    for (fan_in, fan_out) in dims:
        key, kw, kb = jax.random.split(key, 3)
        bound = 1.0 / jnp.sqrt(fan_in)  # matches torch.nn.Linear default init range
        w = jax.random.uniform(kw, (fan_in, fan_out), jnp.float32, -bound, bound)
        b = jax.random.uniform(kb, (fan_out,), jnp.float32, -bound, bound)
        params.append((w, b))
    return params


def reference_forward(x, params):
    """Plain-JAX f32 reference of the PyTorch forward."""
    h = x
    for i, (w, b) in enumerate(params):
        h = h @ w + b
        if i < len(params) - 1:
            h = jax.nn.sigmoid(h)
    return h


if __name__ == "__main__":
    input_size, hidden_size, output_size = 4, 32, 4

    key = jax.random.PRNGKey(0)
    params = init_params(input_size, hidden_size, output_size, key)
    w0_p, w_stack, b_stack = pack_params(params)      # packed once, reused across calls

    act_dtype = _pick_act_dtype()
    # bf16 weights (+ bf16 activations on v6e/v7x) -> loosened tolerance vs. f32 reference.
    tol = 5e-2 if act_dtype == "bfloat16" else 2e-2

    # Small batch: single grid step, no sub-tiling.
    key, kx = jax.random.split(key)
    x = jax.random.normal(kx, (8, input_size), jnp.float32)
    out = jax.block_until_ready(mlp_forward(x, w0_p, w_stack, b_stack, output_size, act_dtype))
    ref = reference_forward(x, params)
    assert out.shape == (8, output_size), out.shape
    assert jnp.allclose(out, ref, atol=tol, rtol=tol), float(jnp.max(jnp.abs(out - ref)))

    # Non-multiple batch: 2 balanced grid steps (both TCs on v7x) + 4-way sub-tiling.
    key, kx2 = jax.random.split(key)
    x2 = jax.random.normal(kx2, (300, input_size), jnp.float32)
    out2 = jax.block_until_ready(mlp_forward(x2, w0_p, w_stack, b_stack, output_size, act_dtype))
    ref2 = reference_forward(x2, params)
    assert out2.shape == (300, output_size), out2.shape
    assert jnp.allclose(out2, ref2, atol=tol, rtol=tol), float(jnp.max(jnp.abs(out2 - ref2)))

    # Larger batch: exercises MAX_TB-capped balanced multi-tile grid.
    key, kx3 = jax.random.split(key)
    x3 = jax.random.normal(kx3, (2500, input_size), jnp.float32)
    out3 = jax.block_until_ready(mlp_forward(x3, w0_p, w_stack, b_stack, output_size, act_dtype))
    ref3 = reference_forward(x3, params)
    assert out3.shape == (2500, output_size), out3.shape
    assert jnp.allclose(out3, ref3, atol=tol, rtol=tol), float(jnp.max(jnp.abs(out3 - ref3)))

    print("KERNEL_OK")
</pallas_src>

<mosaic_0001>
module attributes {stable_mosaic.version = 11 : i64} {
  func.func @_mlp_kernel(%arg0: i32, %arg1: memref<8x8xf32, #tpu.memory_space<vmem>>, %arg2: memref<8x128xbf16, #tpu.memory_space<vmem>>, %arg3: memref<6x128x128xbf16, #tpu.memory_space<vmem>>, %arg4: memref<8x128xf32, #tpu.memory_space<vmem>>, %arg5: memref<8x4xf32, #tpu.memory_space<vmem>>) attributes {dimension_semantics = [#tpu.dimension_semantics<parallel>], iteration_bounds = array<i64: 1>, scalar_prefetch = 0 : i64, scratch_operands = 0 : i64, tpu.core_type = #tpu.core_type<tc>, window_params = [{transform_indices = @transform_0, window_bounds = array<i64: 8, 8>}, {pipeline_mode = #tpu.pipeline_mode<synchronous>, transform_indices = @transform_1, window_bounds = array<i64: 8, 128>}, {pipeline_mode = #tpu.pipeline_mode<synchronous>, transform_indices = @transform_2, window_bounds = array<i64: 6, 128, 128>}, {pipeline_mode = #tpu.pipeline_mode<synchronous>, transform_indices = @transform_3, window_bounds = array<i64: 8, 128>}, {transform_indices = @transform_4, window_bounds = array<i64: 8, 4>}]} {
    %c0 = arith.constant 0 : index
    %c0_0 = arith.constant 0 : index
    %0 = vector.load %arg2[%c0, %c0_0] : memref<8x128xbf16, #tpu.memory_space<vmem>>, vector<8x128xbf16>
    %c0_1 = arith.constant 0 : index
    %c0_2 = arith.constant 0 : index
    %1 = vector.load %arg4[%c0_1, %c0_2] : memref<8x128xf32, #tpu.memory_space<vmem>>, vector<1x128xf32>
    %c0_3 = arith.constant 0 : index
    %c0_4 = arith.constant 0 : index
    %2 = vector.load %arg1[%c0_3, %c0_4] : memref<8x8xf32, #tpu.memory_space<vmem>>, vector<8x8xf32>
    %3 = arith.truncf %2 : vector<8x8xf32> to vector<8x8xbf16>
    %cst = arith.constant dense<0.000000e+00> : vector<8x128xf32>
    %4 = tpu.matmul %3, %0, %cst {dimension_numbers = #tpu.dot_dimension_numbers<[1], [0], [0], [1], [0, 0, 1, 1], [], []>} : vector<8x8xbf16>, vector<8x128xbf16>, vector<8x128xf32> -> vector<8x128xf32>
    %5 = vector.broadcast %1 : vector<1x128xf32> to vector<8x128xf32>
    %6 = arith.addf %4, %5 : vector<8x128xf32>
    %cst_5 = arith.constant 5.000000e-01 : f32
    %7 = vector.broadcast %cst_5 : f32 to vector<8x128xf32>
    %8 = arith.mulf %7, %6 : vector<8x128xf32>
    %9 = math.tanh %8 : vector<8x128xf32>
    %cst_6 = arith.constant 5.000000e-01 : f32
    %10 = vector.broadcast %cst_6 : f32 to vector<8x128xf32>
    %11 = arith.mulf %10, %9 : vector<8x128xf32>
    %cst_7 = arith.constant 5.000000e-01 : f32
    %12 = vector.broadcast %cst_7 : f32 to vector<8x128xf32>
    %13 = arith.addf %11, %12 : vector<8x128xf32>
    %c0_8 = arith.constant 0 : index
    %c0_9 = arith.constant 0 : index
    %c0_10 = arith.constant 0 : index
    %14 = vector.load %arg3[%c0_8, %c0_9, %c0_10] : memref<6x128x128xbf16, #tpu.memory_space<vmem>>, vector<1x128x128xbf16>
    %15 = vector.shape_cast %14 : vector<1x128x128xbf16> to vector<128x128xbf16>
    %c1 = arith.constant 1 : index
    %c0_11 = arith.constant 0 : index
    %16 = vector.load %arg4[%c1, %c0_11] : memref<8x128xf32, #tpu.memory_space<vmem>>, vector<1x128xf32>
    %17 = arith.truncf %13 : vector<8x128xf32> to vector<8x128xbf16>
    %cst_12 = arith.constant dense<0.000000e+00> : vector<8x128xf32>
    %18 = tpu.matmul %17, %15, %cst_12 {dimension_numbers = #tpu.dot_dimension_numbers<[1], [0], [0], [1], [0, 0, 1, 1], [], []>} : vector<8x128xbf16>, vector<128x128xbf16>, vector<8x128xf32> -> vector<8x128xf32>
    %19 = vector.broadcast %16 : vector<1x128xf32> to vector<8x128xf32>
    %20 = arith.addf %18, %19 : vector<8x128xf32>
    %cst_13 = arith.constant 5.000000e-01 : f32
    %21 = vector.broadcast %cst_13 : f32 to vector<8x128xf32>
    %22 = arith.mulf %21, %20 : vector<8x128xf32>
    %23 = math.tanh %22 : vector<8x128xf32>
    %cst_14 = arith.constant 5.000000e-01 : f32
    %24 = vector.broadcast %cst_14 : f32 to vector<8x128xf32>
    %25 = arith.mulf %24, %23 : vector<8x128xf32>
    %cst_15 = arith.constant 5.000000e-01 : f32
    %26 = vector.broadcast %cst_15 : f32 to vector<8x128xf32>
    %27 = arith.addf %25, %26 : vector<8x128xf32>
    %c1_16 = arith.constant 1 : index
    %c0_17 = arith.constant 0 : index
    %c0_18 = arith.constant 0 : index
    %28 = vector.load %arg3[%c1_16, %c0_17, %c0_18] : memref<6x128x128xbf16, #tpu.memory_space<vmem>>, vector<1x128x128xbf16>
    %29 = vector.shape_cast %28 : vector<1x128x128xbf16> to vector<128x128xbf16>
    %c2 = arith.constant 2 : index
    %c0_19 = arith.constant 0 : index
    %30 = vector.load %arg4[%c2, %c0_19] : memref<8x128xf32, #tpu.memory_space<vmem>>, vector<1x128xf32>
    %31 = arith.truncf %27 : vector<8x128xf32> to vector<8x128xbf16>
    %cst_20 = arith.constant dense<0.000000e+00> : vector<8x128xf32>
    %32 = tpu.matmul %31, %29, %cst_20 {dimension_numbers = #tpu.dot_dimension_numbers<[1], [0], [0], [1], [0, 0, 1, 1], [], []>} : vector<8x128xbf16>, vector<128x128xbf16>, vector<8x128xf32> -> vector<8x128xf32>
    %33 = vector.broadcast %30 : vector<1x128xf32> to vector<8x128xf32>
    %34 = arith.addf %32, %33 : vector<8x128xf32>
    %cst_21 = arith.constant 5.000000e-01 : f32
    %35 = vector.broadcast %cst_21 : f32 to vector<8x128xf32>
    %36 = arith.mulf %35, %34 : vector<8x128xf32>
    %37 = math.tanh %36 : vector<8x128xf32>
    %cst_22 = arith.constant 5.000000e-01 : f32
    %38 = vector.broadcast %cst_22 : f32 to vector<8x128xf32>
    %39 = arith.mulf %38, %37 : vector<8x128xf32>
    %cst_23 = arith.constant 5.000000e-01 : f32
    %40 = vector.broadcast %cst_23 : f32 to vector<8x128xf32>
    %41 = arith.addf %39, %40 : vector<8x128xf32>
    %c2_24 = arith.constant 2 : index
    %c0_25 = arith.constant 0 : index
    %c0_26 = arith.constant 0 : index
    %42 = vector.load %arg3[%c2_24, %c0_25, %c0_26] : memref<6x128x128xbf16, #tpu.memory_space<vmem>>, vector<1x128x128xbf16>
    %43 = vector.shape_cast %42 : vector<1x128x128xbf16> to vector<128x128xbf16>
    %c3 = arith.constant 3 : index
    %c0_27 = arith.constant 0 : index
    %44 = vector.load %arg4[%c3, %c0_27] : memref<8x128xf32, #tpu.memory_space<vmem>>, vector<1x128xf32>
    %45 = arith.truncf %41 : vector<8x128xf32> to vector<8x128xbf16>
    %cst_28 = arith.constant dense<0.000000e+00> : vector<8x128xf32>
    %46 = tpu.matmul %45, %43, %cst_28 {dimension_numbers = #tpu.dot_dimension_numbers<[1], [0], [0], [1], [0, 0, 1, 1], [], []>} : vector<8x128xbf16>, vector<128x128xbf16>, vector<8x128xf32> -> vector<8x128xf32>
    %47 = vector.broadcast %44 : vector<1x128xf32> to vector<8x128xf32>
    %48 = arith.addf %46, %47 : vector<8x128xf32>
    %cst_29 = arith.constant 5.000000e-01 : f32
    %49 = vector.broadcast %cst_29 : f32 to vector<8x128xf32>
    %50 = arith.mulf %49, %48 : vector<8x128xf32>
    %51 = math.tanh %50 : vector<8x128xf32>
    %cst_30 = arith.constant 5.000000e-01 : f32
    %52 = vector.broadcast %cst_30 : f32 to vector<8x128xf32>
    %53 = arith.mulf %52, %51 : vector<8x128xf32>
    %cst_31 = arith.constant 5.000000e-01 : f32
    %54 = vector.broadcast %cst_31 : f32 to vector<8x128xf32>
    %55 = arith.addf %53, %54 : vector<8x128xf32>
    %c3_32 = arith.constant 3 : index
    %c0_33 = arith.constant 0 : index
    %c0_34 = arith.constant 0 : index
    %56 = vector.load %arg3[%c3_32, %c0_33, %c0_34] : memref<6x128x128xbf16, #tpu.memory_space<vmem>>, vector<1x128x128xbf16>
    %57 = vector.shape_cast %56 : vector<1x128x128xbf16> to vector<128x128xbf16>
    %c4 = arith.constant 4 : index
    %c0_35 = arith.constant 0 : index
    %58 = vector.load %arg4[%c4, %c0_35] : memref<8x128xf32, #tpu.memory_space<vmem>>, vector<1x128xf32>
    %59 = arith.truncf %55 : vector<8x128xf32> to vector<8x128xbf16>
    %cst_36 = arith.constant dense<0.000000e+00> : vector<8x128xf32>
    %60 = tpu.matmul %59, %57, %cst_36 {dimension_numbers = #tpu.dot_dimension_numbers<[1], [0], [0], [1], [0, 0, 1, 1], [], []>} : vector<8x128xbf16>, vector<128x128xbf16>, vector<8x128xf32> -> vector<8x128xf32>
    %61 = vector.broadcast %58 : vector<1x128xf32> to vector<8x128xf32>
    %62 = arith.addf %60, %61 : vector<8x128xf32>
    %cst_37 = arith.constant 5.000000e-01 : f32
    %63 = vector.broadcast %cst_37 : f32 to vector<8x128xf32>
    %64 = arith.mulf %63, %62 : vector<8x128xf32>
    %65 = math.tanh %64 : vector<8x128xf32>
    %cst_38 = arith.constant 5.000000e-01 : f32
    %66 = vector.broadcast %cst_38 : f32 to vector<8x128xf32>
    %67 = arith.mulf %66, %65 : vector<8x128xf32>
    %cst_39 = arith.constant 5.000000e-01 : f32
    %68 = vector.broadcast %cst_39 : f32 to vector<8x128xf32>
    %69 = arith.addf %67, %68 : vector<8x128xf32>
    %c4_40 = arith.constant 4 : index
    %c0_41 = arith.constant 0 : index
    %c0_42 = arith.constant 0 : index
    %70 = vector.load %arg3[%c4_40, %c0_41, %c0_42] : memref<6x128x128xbf16, #tpu.memory_space<vmem>>, vector<1x128x128xbf16>
    %71 = vector.shape_cast %70 : vector<1x128x128xbf16> to vector<128x128xbf16>
    %c5 = arith.constant 5 : index
    %c0_43 = arith.constant 0 : index
    %72 = vector.load %arg4[%c5, %c0_43] : memref<8x128xf32, #tpu.memory_space<vmem>>, vector<1x128xf32>
    %73 = arith.truncf %69 : vector<8x128xf32> to vector<8x128xbf16>
    %cst_44 = arith.constant dense<0.000000e+00> : vector<8x128xf32>
    %74 = tpu.matmul %73, %71, %cst_44 {dimension_numbers = #tpu.dot_dimension_numbers<[1], [0], [0], [1], [0, 0, 1, 1], [], []>} : vector<8x128xbf16>, vector<128x128xbf16>, vector<8x128xf32> -> vector<8x128xf32>
    %75 = vector.broadcast %72 : vector<1x128xf32> to vector<8x128xf32>
    %76 = arith.addf %74, %75 : vector<8x128xf32>
    %cst_45 = arith.constant 5.000000e-01 : f32
    %77 = vector.broadcast %cst_45 : f32 to vector<8x128xf32>
    %78 = arith.mulf %77, %76 : vector<8x128xf32>
    %79 = math.tanh %78 : vector<8x128xf32>
    %cst_46 = arith.constant 5.000000e-01 : f32
    %80 = vector.broadcast %cst_46 : f32 to vector<8x128xf32>
    %81 = arith.mulf %80, %79 : vector<8x128xf32>
    %cst_47 = arith.constant 5.000000e-01 : f32
    %82 = vector.broadcast %cst_47 : f32 to vector<8x128xf32>
    %83 = arith.addf %81, %82 : vector<8x128xf32>
    %c5_48 = arith.constant 5 : index
    %c0_49 = arith.constant 0 : index
    %c0_50 = arith.constant 0 : index
    %84 = vector.load %arg3[%c5_48, %c0_49, %c0_50] : memref<6x128x128xbf16, #tpu.memory_space<vmem>>, vector<1x128x128xbf16>
    %85 = vector.shape_cast %84 : vector<1x128x128xbf16> to vector<128x128xbf16>
    %c6 = arith.constant 6 : index
    %c0_51 = arith.constant 0 : index
    %86 = vector.load %arg4[%c6, %c0_51] : memref<8x128xf32, #tpu.memory_space<vmem>>, vector<1x128xf32>
    %87 = arith.truncf %83 : vector<8x128xf32> to vector<8x128xbf16>
    %cst_52 = arith.constant dense<0.000000e+00> : vector<8x128xf32>
    %88 = tpu.matmul %87, %85, %cst_52 {dimension_numbers = #tpu.dot_dimension_numbers<[1], [0], [0], [1], [0, 0, 1, 1], [], []>} : vector<8x128xbf16>, vector<128x128xbf16>, vector<8x128xf32> -> vector<8x128xf32>
    %89 = vector.broadcast %86 : vector<1x128xf32> to vector<8x128xf32>
    %90 = arith.addf %88, %89 : vector<8x128xf32>
    %91 = vector.extract_strided_slice %90 {offsets = [0, 0], sizes = [8, 4], strides = [1, 1]} : vector<8x128xf32> to vector<8x4xf32>
    %c0_53 = arith.constant 0 : index
    %c0_54 = arith.constant 0 : index
    %92 = vector.load %arg5[%c0_53, %c0_54] : memref<8x4xf32, #tpu.memory_space<vmem>>, vector<8x4xf32>
    tpu.vector_store %arg5[%c0_53, %c0_54], %91 {strides = array<i32>} : memref<8x4xf32, #tpu.memory_space<vmem>>, vector<8x4xf32>,
    return
  }
  func.func @transform_0(%arg0: i32) -> (i32, i32) {
    %c0_i32 = arith.constant 0 : i32
    %c0_i32_0 = arith.constant 0 : i32
    return %arg0, %c0_i32 : i32, i32
  }
  func.func @transform_1(%arg0: i32) -> (i32, i32) {
    %c0_i32 = arith.constant 0 : i32
    %c0_i32_0 = arith.constant 0 : i32
    %c0_i32_1 = arith.constant 0 : i32
    return %c0_i32, %c0_i32_0 : i32, i32
  }
  func.func @transform_2(%arg0: i32) -> (i32, i32, i32) {
    %c0_i32 = arith.constant 0 : i32
    %c0_i32_0 = arith.constant 0 : i32
    %c0_i32_1 = arith.constant 0 : i32
    %c0_i32_2 = arith.constant 0 : i32
    return %c0_i32, %c0_i32_0, %c0_i32_1 : i32, i32, i32
  }
  func.func @transform_3(%arg0: i32) -> (i32, i32) {
    %c0_i32 = arith.constant 0 : i32
    %c0_i32_0 = arith.constant 0 : i32
    %c0_i32_1 = arith.constant 0 : i32
    return %c0_i32, %c0_i32_0 : i32, i32
  }
  func.func @transform_4(%arg0: i32) -> (i32, i32) {
    %c0_i32 = arith.constant 0 : i32
    %c0_i32_0 = arith.constant 0 : i32
    return %arg0, %c0_i32 : i32, i32
  }
}

</mosaic_0001>

<llo_original>
// kernel: mlp_forward.1
$region0: #{mlp_forward.1}
  #allocation0 [shape = 'u32[]', space=smem, size = 0x4, offset = 0x4, fixed_abs, tag = 'smem constant byte address 0x4 - core index']
  #allocation1 [shape = 'u32[72,128]{1,0:T(1,128)}', space=vmem, size = 0x9000, scoped, tag = 'internal scratch']
  %s0 = inlined_call_operand.vmem [shape: f32[8,8], index: 0, kind: input, shape index: {}]
  %s1 = inlined_call_operand.vmem [shape: bf16[8,128], index: 1, kind: input, shape index: {}]
  %s2 = inlined_call_operand.hbm [shape: bf16[6,128,128], index: 2, kind: input, shape index: {}]
  %s3 = inlined_call_operand.vmem [shape: f32[8,128], index: 3, kind: input, shape index: {}]
  %s4 = inlined_call_operand.vmem [shape: f32[8,4], index: 4, kind: output, shape index: {}]
  %s5 = sld [smem:[#allocation0]]
  $region30: #{mlp_forward.1} parent=0
    _
  %s7 = ssub.s32 1, %s5
  %s8 = scalar_select 0, %s7, %s5
  $region1: #{mlp_forward.1} parent=0
    #allocation2 [shape = 'u8[196608]{0}', space=vmem, size = 0x30000, scoped, tag = 'input window, operand 2, single buffered']
    #allocation3 [shape = 's32[1]{0}', space=sflag, size = 0x4, scoped, tag = 'scoped memory for mlp_forward.1']
    %9 = vsyncpa [#allocation3], 0
    // Predicated region
    $region2: #{mlp_forward.1} parent=1 // pred_check
      _
    $region3: #{mlp_forward.1} parent=1 // pred_check_branch
      %11 = sbr.rel (0) target = $region5
    $region4: #{mlp_forward.1} parent=1 // pred_region
      _
    $region5: #{mlp_forward.1} parent=1 // pred_fallthru
      _
    // Predicated region
    $region6: #{mlp_forward.1} parent=1 // pred_check
      _
    $region7: #{mlp_forward.1} parent=1 // pred_check_branch
      %13 = sbr.rel (0) target = $region9
    $region8: #{mlp_forward.1} parent=1 // pred_region
      _
    $region9: #{mlp_forward.1} parent=1 // pred_fallthru
      _
    // Predicated region
    $region10: #{mlp_forward.1} parent=1 // pred_check
      _
    $region11: #{mlp_forward.1} parent=1 // pred_check_branch
      %15 = sbr.rel (0) target = $region13
    $region12: #{mlp_forward.1} parent=1 // pred_region
      %17 = vsyncadd [#allocation3], 0
      %s18 = sshll.u32 %s2, 4
      %s19 = int_to_ptr.hbm [resolvable:$true] %s18
      %s20 = sshll.u32 [#allocation2], 4
      %s21 = int_to_ptr.vmem [resolvable:$true] %s20
      %26 = dma.hbm_to_vmem [thread:$0]  %s19, 6144, %s21, [#allocation3], 64, 64, 4
    $region13: #{mlp_forward.1} parent=1 // pred_fallthru
      _
    // Predicated region
    $region14: #{mlp_forward.1} parent=1 // pred_check
      _
    $region15: #{mlp_forward.1} parent=1 // pred_check_branch
      %28 = sbr.rel (0) target = $region17
    $region16: #{mlp_forward.1} parent=1 // pred_region
      _
    $region17: #{mlp_forward.1} parent=1 // pred_fallthru
      _
    // Predicated region
    $region18: #{mlp_forward.1} parent=1 // pred_check
      _
    $region19: #{mlp_forward.1} parent=1 // pred_check_branch
      %30 = sbr.rel (0) target = $region21
    $region20: #{mlp_forward.1} parent=1 // pred_region
      %32 = dma.done [#allocation3], 6144
    $region21: #{mlp_forward.1} parent=1 // pred_fallthru
      _
    %v34 = vld [vmem:[%s1] sm:$0xf]
    %v35 = vld [vmem:[%s3] sm:$0x1]
    %v36 = vld [vmem:[%s0] sm:$0xff]
    %v37 = vpack.c.bf16 %v36, %v36
    %v38 = vperm.slane %v35, 0
    %vm39 = vcmask 64512
    %v41 = vsel %vm39, %v37, 0
    %vm43 = vcmask 1043456
    %v45 = vsel %vm43, %v34, 0
    %47 = vmatpush.bf16.msra.mxu0 0
    %48 = vmatpush.bf16.msra.mxu0 0
    %49 = vmatpush.bf16.msra.mxu0 0
    %50 = vmatpush.bf16.msra.mxu0 0
    %51 = vmatpush.bf16.msra.mxu0 0
    %52 = vmatpush.bf16.msra.mxu0 0
    %53 = vmatpush.bf16.msra.mxu0 0
    %54 = vmatpush.bf16.msra.mxu0 %v45
    %55 = vmatmul.bf16.gmra.mxu0 %v41
    %v56 = vpop.f32.mrf.mxu0
    %v57 = vadd.f32 %v38, %v56
    %v58 = vpop.f32.mrf.mxu0
    %59 = vdwg.mxu0
    %v60 = vmul.f32 %v57, 0.5
    %v61 = vtanh.pop %v60
    %v62 = vmul.f32 %v61, 0.5
    %v63 = vadd.f32 %v62, 0.5
    %v64 = vld [vmem:[#allocation2] sm:$0xf]
    %v65 = vld [vmem:[#allocation2 + $0x4] sm:$0xf]
    %v66 = vld [vmem:[#allocation2 + $0x8] sm:$0xf]
    %v67 = vld [vmem:[#allocation2 + $0xc] sm:$0xf]
    %v68 = vld [vmem:[#allocation2 + $0x10] sm:$0xf]
    %v69 = vld [vmem:[#allocation2 + $0x14] sm:$0xf]
    %v70 = vld [vmem:[#allocation2 + $0x18] sm:$0xf]
    %v71 = vld [vmem:[#allocation2 + $0x1c] sm:$0xf]
    %v72 = vld [vmem:[#allocation2 + $0x20] sm:$0xf]
    %v73 = vld [vmem:[#allocation2 + $0x24] sm:$0xf]
    %v74 = vld [vmem:[#allocation2 + $0x28] sm:$0xf]
    %v75 = vld [vmem:[#allocation2 + $0x2c] sm:$0xf]
    %v76 = vld [vmem:[#allocation2 + $0x30] sm:$0xf]
    %v77 = vld [vmem:[#allocation2 + $0x34] sm:$0xf]
    %v78 = vld [vmem:[#allocation2 + $0x38] sm:$0xf]
    %v79 = vld [vmem:[#allocation2 + $0x3c] sm:$0xf]
    %v80 = vld [vmem:[%s3 + $0x1] sm:$0x1]
    %v81 = vpack.c.bf16 %v63, %v63
    %v82 = vperm.slane %v80, 0
    %v99 = vunpack.c.l.b16 %v64
    %v100 = vunpack.c.l.b16 %v65
    %v101 = vunpack.c.l.b16 %v66
    %v102 = vunpack.c.l.b16 %v67
    %v103 = vunpack.c.l.b16 %v68
    %v104 = vunpack.c.l.b16 %v69
    %v105 = vunpack.c.l.b16 %v70
    %v106 = vunpack.c.l.b16 %v71
    %v107 = vunpack.c.l.b16 %v72
    %v108 = vunpack.c.l.b16 %v73
    %v109 = vunpack.c.l.b16 %v74
    %v110 = vunpack.c.l.b16 %v75
    %v111 = vunpack.c.l.b16 %v76
    %v112 = vunpack.c.l.b16 %v77
    %v113 = vunpack.c.l.b16 %v78
    %v114 = vunpack.c.l.b16 %v79
    %v115 = vpack.c.b16 %v100, %v99
    %v116 = vpack.c.b16 %v102, %v101
    %v117 = vpack.c.b16 %v104, %v103
    %v118 = vpack.c.b16 %v106, %v105
    %v119 = vpack.c.b16 %v108, %v107
    %v120 = vpack.c.b16 %v110, %v109
    %v121 = vpack.c.b16 %v112, %v111
    %v122 = vpack.c.b16 %v114, %v113
    %131 = vmatpush.bf16.msra.mxu0 %v122
    %132 = vmatpush.bf16.msra.mxu0 %v121
    %133 = vmatpush.bf16.msra.mxu0 %v120
    %134 = vmatpush.bf16.msra.mxu0 %v119
    %135 = vmatpush.bf16.msra.mxu0 %v118
    %136 = vmatpush.bf16.msra.mxu0 %v117
    %137 = vmatpush.bf16.msra.mxu0 %v116
    %138 = vmatpush.bf16.msra.mxu0 %v115
    %139 = vmatmul.bf16.gmra.mxu0 %v81
    %v140 = vpop.f32.mrf.mxu0
    %v141 = vadd.f32 %v82, %v140
    %v142 = vpop.f32.mrf.mxu0
    %143 = vdwg.mxu0
    %v144 = vmul.f32 %v141, 0.5
    %v145 = vtanh.pop %v144
    %v146 = vmul.f32 %v145, 0.5
    %v147 = vadd.f32 %v146, 0.5
    %s148 = scalar_lea.vmem [#allocation2], 64
    %v149 = vld [vmem:[%s148] sm:$0xf]
    %v150 = vld [vmem:[%s148 + $0x4] sm:$0xf]
    %v151 = vld [vmem:[%s148 + $0x8] sm:$0xf]
    %v152 = vld [vmem:[%s148 + $0xc] sm:$0xf]
    %v153 = vld [vmem:[%s148 + $0x10] sm:$0xf]
    %v154 = vld [vmem:[%s148 + $0x14] sm:$0xf]
    %v155 = vld [vmem:[%s148 + $0x18] sm:$0xf]
    %v156 = vld [vmem:[%s148 + $0x1c] sm:$0xf]
    %v157 = vld [vmem:[%s148 + $0x20] sm:$0xf]
    %v158 = vld [vmem:[%s148 + $0x24] sm:$0xf]
    %v159 = vld [vmem:[%s148 + $0x28] sm:$0xf]
    %v160 = vld [vmem:[%s148 + $0x2c] sm:$0xf]
    %v161 = vld [vmem:[%s148 + $0x30] sm:$0xf]
    %v162 = vld [vmem:[%s148 + $0x34] sm:$0xf]
    %v163 = vld [vmem:[%s148 + $0x38] sm:$0xf]
    %v164 = vld [vmem:[%s148 + $0x3c] sm:$0xf]
    %v165 = vld [vmem:[%s3 + $0x2] sm:$0x1]
    %v166 = vpack.c.bf16 %v147, %v147
    %v167 = vperm.slane %v165, 0
    %v184 = vunpack.c.l.b16 %v149
    %v185 = vunpack.c.l.b16 %v150
    %v186 = vunpack.c.l.b16 %v151
    %v187 = vunpack.c.l.b16 %v152
    %v188 = vunpack.c.l.b16 %v153
    %v189 = vunpack.c.l.b16 %v154
    %v190 = vunpack.c.l.b16 %v155
    %v191 = vunpack.c.l.b16 %v156
    %v192 = vunpack.c.l.b16 %v157
    %v193 = vunpack.c.l.b16 %v158
    %v194 = vunpack.c.l.b16 %v159
    %v195 = vunpack.c.l.b16 %v160
    %v196 = vunpack.c.l.b16 %v161
    %v197 = vunpack.c.l.b16 %v162
    %v198 = vunpack.c.l.b16 %v163
    %v199 = vunpack.c.l.b16 %v164
    %v200 = vpack.c.b16 %v185, %v184
    %v201 = vpack.c.b16 %v187, %v186
    %v202 = vpack.c.b16 %v189, %v188
    %v203 = vpack.c.b16 %v191, %v190
    %v204 = vpack.c.b16 %v193, %v192
    %v205 = vpack.c.b16 %v195, %v194
    %v206 = vpack.c.b16 %v197, %v196
    %v207 = vpack.c.b16 %v199, %v198
    %216 = vmatpush.bf16.msra.mxu0 %v207
    %217 = vmatpush.bf16.msra.mxu0 %v206
    %218 = vmatpush.bf16.msra.mxu0 %v205
    %219 = vmatpush.bf16.msra.mxu0 %v204
    %220 = vmatpush.bf16.msra.mxu0 %v203
    %221 = vmatpush.bf16.msra.mxu0 %v202
    %222 = vmatpush.bf16.msra.mxu0 %v201
    %223 = vmatpush.bf16.msra.mxu0 %v200
    %224 = vmatmul.bf16.gmra.mxu0 %v166
    %v225 = vpop.f32.mrf.mxu0
    %v226 = vadd.f32 %v167, %v225
    %v227 = vpop.f32.mrf.mxu0
    %228 = vdwg.mxu0
    %v229 = vmul.f32 %v226, 0.5
    %v230 = vtanh.pop %v229
    %v231 = vmul.f32 %v230, 0.5
    %v232 = vadd.f32 %v231, 0.5
    %s233 = scalar_lea.vmem [#allocation2], 128
    %v234 = vld [vmem:[%s233] sm:$0xf]
    %v235 = vld [vmem:[%s233 + $0x4] sm:$0xf]
    %v236 = vld [vmem:[%s233 + $0x8] sm:$0xf]
    %v237 = vld [vmem:[%s233 + $0xc] sm:$0xf]
    %v238 = vld [vmem:[%s233 + $0x10] sm:$0xf]
    %v239 = vld [vmem:[%s233 + $0x14] sm:$0xf]
    %v240 = vld [vmem:[%s233 + $0x18] sm:$0xf]
    %v241 = vld [vmem:[%s233 + $0x1c] sm:$0xf]
    %v242 = vld [vmem:[%s233 + $0x20] sm:$0xf]
    %v243 = vld [vmem:[%s233 + $0x24] sm:$0xf]
    %v244 = vld [vmem:[%s233 + $0x28] sm:$0xf]
    %v245 = vld [vmem:[%s233 + $0x2c] sm:$0xf]
    %v246 = vld [vmem:[%s233 + $0x30] sm:$0xf]
    %v247 = vld [vmem:[%s233 + $0x34] sm:$0xf]
    %v248 = vld [vmem:[%s233 + $0x38] sm:$0xf]
    %v249 = vld [vmem:[%s233 + $0x3c] sm:$0xf]
    %v250 = vld [vmem:[%s3 + $0x3] sm:$0x1]
    %v251 = vpack.c.bf16 %v232, %v232
    %v252 = vperm.slane %v250, 0
    %v269 = vunpack.c.l.b16 %v234
    %v270 = vunpack.c.l.b16 %v235
    %v271 = vunpack.c.l.b16 %v236
    %v272 = vunpack.c.l.b16 %v237
    %v273 = vunpack.c.l.b16 %v238
    %v274 = vunpack.c.l.b16 %v239
    %v275 = vunpack.c.l.b16 %v240
    %v276 = vunpack.c.l.b16 %v241
    %v277 = vunpack.c.l.b16 %v242
    %v278 = vunpack.c.l.b16 %v243
    %v279 = vunpack.c.l.b16 %v244
    %v280 = vunpack.c.l.b16 %v245
    %v281 = vunpack.c.l.b16 %v246
    %v282 = vunpack.c.l.b16 %v247
    %v283 = vunpack.c.l.b16 %v248
    %v284 = vunpack.c.l.b16 %v249
    %v285 = vpack.c.b16 %v270, %v269
    %v286 = vpack.c.b16 %v272, %v271
    %v287 = vpack.c.b16 %v274, %v273
    %v288 = vpack.c.b16 %v276, %v275
    %v289 = vpack.c.b16 %v278, %v277
    %v290 = vpack.c.b16 %v280, %v279
    %v291 = vpack.c.b16 %v282, %v281
    %v292 = vpack.c.b16 %v284, %v283
    %301 = vmatpush.bf16.msra.mxu0 %v292
    %302 = vmatpush.bf16.msra.mxu0 %v291
    %303 = vmatpush.bf16.msra.mxu0 %v290
    %304 = vmatpush.bf16.msra.mxu0 %v289
    %305 = vmatpush.bf16.msra.mxu0 %v288
    %306 = vmatpush.bf16.msra.mxu0 %v287
    %307 = vmatpush.bf16.msra.mxu0 %v286
    %308 = vmatpush.bf16.msra.mxu0 %v285
    %309 = vmatmul.bf16.gmra.mxu0 %v251
    %v310 = vpop.f32.mrf.mxu0
    %v311 = vadd.f32 %v252, %v310
    %v312 = vpop.f32.mrf.mxu0
    %313 = vdwg.mxu0
    %v314 = vmul.f32 %v311, 0.5
    %v315 = vtanh.pop %v314
    %v316 = vmul.f32 %v315, 0.5
    %v317 = vadd.f32 %v316, 0.5
    %s318 = scalar_lea.vmem [#allocation2], 192
    %v319 = vld [vmem:[%s318] sm:$0xf]
    %v320 = vld [vmem:[%s318 + $0x4] sm:$0xf]
    %v321 = vld [vmem:[%s318 + $0x8] sm:$0xf]
    %v322 = vld [vmem:[%s318 + $0xc] sm:$0xf]
    %v323 = vld [vmem:[%s318 + $0x10] sm:$0xf]
    %v324 = vld [vmem:[%s318 + $0x14] sm:$0xf]
    %v325 = vld [vmem:[%s318 + $0x18] sm:$0xf]
    %v326 = vld [vmem:[%s318 + $0x1c] sm:$0xf]
    %v327 = vld [vmem:[%s318 + $0x20] sm:$0xf]
    %v328 = vld [vmem:[%s318 + $0x24] sm:$0xf]
    %v329 = vld [vmem:[%s318 + $0x28] sm:$0xf]
    %v330 = vld [vmem:[%s318 + $0x2c] sm:$0xf]
    %v331 = vld [vmem:[%s318 + $0x30] sm:$0xf]
    %v332 = vld [vmem:[%s318 + $0x34] sm:$0xf]
    %v333 = vld [vmem:[%s318 + $0x38] sm:$0xf]
    %v334 = vld [vmem:[%s318 + $0x3c] sm:$0xf]
    %v335 = vld [vmem:[%s3 + $0x4] sm:$0x1]
    %v336 = vpack.c.bf16 %v317, %v317
    %v337 = vperm.slane %v335, 0
    %v354 = vunpack.c.l.b16 %v319
    %v355 = vunpack.c.l.b16 %v320
    %v356 = vunpack.c.l.b16 %v321
    %v357 = vunpack.c.l.b16 %v322
    %v358 = vunpack.c.l.b16 %v323
    %v359 = vunpack.c.l.b16 %v324
    %v360 = vunpack.c.l.b16 %v325
    %v361 = vunpack.c.l.b16 %v326
    %v362 = vunpack.c.l.b16 %v327
    %v363 = vunpack.c.l.b16 %v328
    %v364 = vunpack.c.l.b16 %v329
    %v365 = vunpack.c.l.b16 %v330
    %v366 = vunpack.c.l.b16 %v331
    %v367 = vunpack.c.l.b16 %v332
    %v368 = vunpack.c.l.b16 %v333
    %v369 = vunpack.c.l.b16 %v334
    %v370 = vpack.c.b16 %v355, %v354
    %v371 = vpack.c.b16 %v357, %v356
    %v372 = vpack.c.b16 %v359, %v358
    %v373 = vpack.c.b16 %v361, %v360
    %v374 = vpack.c.b16 %v363, %v362
    %v375 = vpack.c.b16 %v365, %v364
    %v376 = vpack.c.b16 %v367, %v366
    %v377 = vpack.c.b16 %v369, %v368
    %386 = vmatpush.bf16.msra.mxu0 %v377
    %387 = vmatpush.bf16.msra.mxu0 %v376
    %388 = vmatpush.bf16.msra.mxu0 %v375
    %389 = vmatpush.bf16.msra.mxu0 %v374
    %390 = vmatpush.bf16.msra.mxu0 %v373
    %391 = vmatpush.bf16.msra.mxu0 %v372
    %392 = vmatpush.bf16.msra.mxu0 %v371
    %393 = vmatpush.bf16.msra.mxu0 %v370
    %394 = vmatmul.bf16.gmra.mxu0 %v336
    %v395 = vpop.f32.mrf.mxu0
    %v396 = vadd.f32 %v337, %v395
    %v397 = vpop.f32.mrf.mxu0
    %398 = vdwg.mxu0
    %v399 = vmul.f32 %v396, 0.5
    %v400 = vtanh.pop %v399
    %v401 = vmul.f32 %v400, 0.5
    %v402 = vadd.f32 %v401, 0.5
    %s403 = scalar_lea.vmem [#allocation2], 256
    %v404 = vld [vmem:[%s403] sm:$0xf]
    %v405 = vld [vmem:[%s403 + $0x4] sm:$0xf]
    %v406 = vld [vmem:[%s403 + $0x8] sm:$0xf]
    %v407 = vld [vmem:[%s403 + $0xc] sm:$0xf]
    %v408 = vld [vmem:[%s403 + $0x10] sm:$0xf]
    %v409 = vld [vmem:[%s403 + $0x14] sm:$0xf]
    %v410 = vld [vmem:[%s403 + $0x18] sm:$0xf]
    %v411 = vld [vmem:[%s403 + $0x1c] sm:$0xf]
    %v412 = vld [vmem:[%s403 + $0x20] sm:$0xf]
    %v413 = vld [vmem:[%s403 + $0x24] sm:$0xf]
    %v414 = vld [vmem:[%s403 + $0x28] sm:$0xf]
    %v415 = vld [vmem:[%s403 + $0x2c] sm:$0xf]
    %v416 = vld [vmem:[%s403 + $0x30] sm:$0xf]
    %v417 = vld [vmem:[%s403 + $0x34] sm:$0xf]
    %v418 = vld [vmem:[%s403 + $0x38] sm:$0xf]
    %v419 = vld [vmem:[%s403 + $0x3c] sm:$0xf]
    %v420 = vld [vmem:[%s3 + $0x5] sm:$0x1]
    %v421 = vpack.c.bf16 %v402, %v402
    %v422 = vperm.slane %v420, 0
    %v439 = vunpack.c.l.b16 %v404
    %v440 = vunpack.c.l.b16 %v405
    %v441 = vunpack.c.l.b16 %v406
    %v442 = vunpack.c.l.b16 %v407
    %v443 = vunpack.c.l.b16 %v408
    %v444 = vunpack.c.l.b16 %v409
    %v445 = vunpack.c.l.b16 %v410
    %v446 = vunpack.c.l.b16 %v411
    %v447 = vunpack.c.l.b16 %v412
    %v448 = vunpack.c.l.b16 %v413
    %v449 = vunpack.c.l.b16 %v414
    %v450 = vunpack.c.l.b16 %v415
    %v451 = vunpack.c.l.b16 %v416
    %v452 = vunpack.c.l.b16 %v417
    %v453 = vunpack.c.l.b16 %v418
    %v454 = vunpack.c.l.b16 %v419
    %v455 = vpack.c.b16 %v440, %v439
    %v456 = vpack.c.b16 %v442, %v441
    %v457 = vpack.c.b16 %v444, %v443
    %v458 = vpack.c.b16 %v446, %v445
    %v459 = vpack.c.b16 %v448, %v447
    %v460 = vpack.c.b16 %v450, %v449
    %v461 = vpack.c.b16 %v452, %v451
    %v462 = vpack.c.b16 %v454, %v453
    %471 = vmatpush.bf16.msra.mxu0 %v462
    %472 = vmatpush.bf16.msra.mxu0 %v461
    %473 = vmatpush.bf16.msra.mxu0 %v460
    %474 = vmatpush.bf16.msra.mxu0 %v459
    %475 = vmatpush.bf16.msra.mxu0 %v458
    %476 = vmatpush.bf16.msra.mxu0 %v457
    %477 = vmatpush.bf16.msra.mxu0 %v456
    %478 = vmatpush.bf16.msra.mxu0 %v455
    %479 = vmatmul.bf16.gmra.mxu0 %v421
    %v480 = vpop.f32.mrf.mxu0
    %v481 = vadd.f32 %v422, %v480
    %v482 = vpop.f32.mrf.mxu0
    %483 = vdwg.mxu0
    %v484 = vmul.f32 %v481, 0.5
    %v485 = vtanh.pop %v484
    %v486 = vmul.f32 %v485, 0.5
    %v487 = vadd.f32 %v486, 0.5
    %s488 = scalar_lea.vmem [#allocation2], 320
    %v489 = vld [vmem:[%s488] sm:$0xf]
    %v490 = vld [vmem:[%s488 + $0x4] sm:$0xf]
    %v491 = vld [vmem:[%s488 + $0x8] sm:$0xf]
    %v492 = vld [vmem:[%s488 + $0xc] sm:$0xf]
    %v493 = vld [vmem:[%s488 + $0x10] sm:$0xf]
    %v494 = vld [vmem:[%s488 + $0x14] sm:$0xf]
    %v495 = vld [vmem:[%s488 + $0x18] sm:$0xf]
    %v496 = vld [vmem:[%s488 + $0x1c] sm:$0xf]
    %v497 = vld [vmem:[%s488 + $0x20] sm:$0xf]
    %v498 = vld [vmem:[%s488 + $0x24] sm:$0xf]
    %v499 = vld [vmem:[%s488 + $0x28] sm:$0xf]
    %v500 = vld [vmem:[%s488 + $0x2c] sm:$0xf]
    %v501 = vld [vmem:[%s488 + $0x30] sm:$0xf]
    %v502 = vld [vmem:[%s488 + $0x34] sm:$0xf]
    %v503 = vld [vmem:[%s488 + $0x38] sm:$0xf]
    %v504 = vld [vmem:[%s488 + $0x3c] sm:$0xf]
    %v505 = vld [vmem:[%s3 + $0x6] sm:$0x1]
    %v506 = vpack.c.bf16 %v487, %v487
    %v507 = vperm.slane %v505, 0
    %v524 = vunpack.c.l.b16 %v489
    %v525 = vunpack.c.l.b16 %v490
    %v526 = vunpack.c.l.b16 %v491
    %v527 = vunpack.c.l.b16 %v492
    %v528 = vunpack.c.l.b16 %v493
    %v529 = vunpack.c.l.b16 %v494
    %v530 = vunpack.c.l.b16 %v495
    %v531 = vunpack.c.l.b16 %v496
    %v532 = vunpack.c.l.b16 %v497
    %v533 = vunpack.c.l.b16 %v498
    %v534 = vunpack.c.l.b16 %v499
    %v535 = vunpack.c.l.b16 %v500
    %v536 = vunpack.c.l.b16 %v501
    %v537 = vunpack.c.l.b16 %v502
    %v538 = vunpack.c.l.b16 %v503
    %v539 = vunpack.c.l.b16 %v504
    %v540 = vpack.c.b16 %v525, %v524
    %v541 = vpack.c.b16 %v527, %v526
    %v542 = vpack.c.b16 %v529, %v528
    %v543 = vpack.c.b16 %v531, %v530
    %v544 = vpack.c.b16 %v533, %v532
    %v545 = vpack.c.b16 %v535, %v534
    %v546 = vpack.c.b16 %v537, %v536
    %v547 = vpack.c.b16 %v539, %v538
    %556 = vmatpush.bf16.msra.mxu0 %v547
    %557 = vmatpush.bf16.msra.mxu0 %v546
    %558 = vmatpush.bf16.msra.mxu0 %v545
    %559 = vmatpush.bf16.msra.mxu0 %v544
    %560 = vmatpush.bf16.msra.mxu0 %v543
    %561 = vmatpush.bf16.msra.mxu0 %v542
    %562 = vmatpush.bf16.msra.mxu0 %v541
    %563 = vmatpush.bf16.msra.mxu0 %v540
    %564 = vmatmul.bf16.gmra.mxu0 %v506
    %v565 = vpop.f32.mrf.mxu0
    %v566 = vadd.f32 %v507, %v565
    %v567 = vpop.f32.mrf.mxu0
    %568 = vdwg.mxu0
    %vm569 = vcmask 31744
    %570 = vst.msk [vmem:[%s4] sm:$0xff] %vm569, %v566
    // Predicated region
    $region22: #{mlp_forward.1} parent=1 // pred_check
      _
    $region23: #{mlp_forward.1} parent=1 // pred_check_branch
      %572 = sbr.rel (0) target = $region25
    $region24: #{mlp_forward.1} parent=1 // pred_region
      _
    $region25: #{mlp_forward.1} parent=1 // pred_fallthru
      _
    // Predicated region
    $region26: #{mlp_forward.1} parent=1 // pred_check
      _
    $region27: #{mlp_forward.1} parent=1 // pred_check_branch
      %574 = sbr.rel (0) target = $region29
    $region28: #{mlp_forward.1} parent=1 // pred_region
      _
    $region29: #{mlp_forward.1} parent=1 // pred_fallthru
      _
    %575 = vsyncpa [#allocation3], 1

</llo_original>
